<compile_context>
chip_gen: v7x
topology: tpu7x:2x2x1
jax: 0.10.0
libtpu: 0.0.40
codegen_flags: <defaults>
</compile_context>

<pallas_src>
import functools

import jax
import jax.numpy as jnp
from jax.experimental import pallas as pl
from jax.experimental.pallas import tpu as pltpu

LN_EPS = 1e-5
NODE_TILE = 256                    # node tile: multiple of 8 (sublane), 128 (lane), 256 (v6e/v7x MXU)
VMEM_LIMIT = 32 * 1024 * 1024      # explicit scoped-VMEM budget; safe on v5e/v6e (128 MiB) and v7x (64 MiB)


def _round_up(n, m):
    return ((n + m - 1) // m) * m


def _layernorm(h, gamma, beta):
    mu = jnp.mean(h, axis=-1, keepdims=True)
    var = jnp.mean((h - mu) ** 2, axis=-1, keepdims=True)
    return (h - mu) * jax.lax.rsqrt(var + LN_EPS) * gamma + beta


# ----------------------------------------------------------------------------- layer 1
# z[i-tile] = LN1( relu( (A_hat @ LN0(x))[i] @ W1 + b1 ) ) @ W2
def _layer1_kernel(a_ref, x_ref, g0_ref, b0_ref, w1_ref, bias1_ref,
                   g1_ref, b1_ref, w2_ref, z_ref, acc_ref):
    k = pl.program_id(1)

    @pl.when(k == 0)
    def _():
        acc_ref[...] = jnp.zeros_like(acc_ref)

    # Input LayerNorm on the current source-node tile (f32 math). Recomputed per row-tile;
    # negligible next to the [tm,tk]x[tk,f_in] MXU work.
    h0 = _layernorm(x_ref[...], g0_ref[...], b0_ref[...])

    # Dominant O(N^2) matmul: bf16 MXU inputs, f32 accumulation.
    acc_ref[...] += jnp.dot(a_ref[...], h0.astype(jnp.bfloat16),
                            preferred_element_type=jnp.float32)

    @pl.when(k == pl.num_programs(1) - 1)
    def _():
        agg = acc_ref[...]                                            # (A_hat @ LN0(x))[i]  [tm, f_in]
        h1 = jnp.dot(agg.astype(jnp.bfloat16), w1_ref[...],
                     preferred_element_type=jnp.float32) + bias1_ref[...]
        h1 = jnp.maximum(h1, 0.0)                                     # ReLU
        h1 = _layernorm(h1, g1_ref[...], b1_ref[...])                 # norm1
        # TODO(synk): training-mode dropout (p=0.2) omitted; eval-mode dropout is identity.
        z_ref[...] = jnp.dot(h1.astype(jnp.bfloat16), w2_ref[...],    # pre-apply W2 (narrow side)
                             preferred_element_type=jnp.float32)


# ----------------------------------------------------------------------------- layer 2
# h2[i-tile] = LN2( relu( (A_hat @ z)[i] + b2 ) )
def _layer2_kernel(a_ref, z_ref, bias2_ref, g2_ref, b2_ref, h2_ref, acc_ref):
    k = pl.program_id(1)

    @pl.when(k == 0)
    def _():
        acc_ref[...] = jnp.zeros_like(acc_ref)

    acc_ref[...] += jnp.dot(a_ref[...], z_ref[...].astype(jnp.bfloat16),
                            preferred_element_type=jnp.float32)

    @pl.when(k == pl.num_programs(1) - 1)
    def _():
        h2 = acc_ref[...] + bias2_ref[...]
        h2 = jnp.maximum(h2, 0.0)                                     # ReLU
        h2 = _layernorm(h2, g2_ref[...], b2_ref[...])                 # norm2
        # TODO(synk): training-mode dropout (p=0.2) omitted; eval-mode dropout is identity.
        h2_ref[...] = h2


# ----------------------------------------------------------------------------- global mean pool
def _mean_pool_kernel(h_ref, out_ref, acc_ref, *, tm, n_valid):
    i = pl.program_id(0)

    @pl.when(i == 0)
    def _():
        acc_ref[...] = jnp.zeros_like(acc_ref)

    h = h_ref[...]
    row = i * tm + jax.lax.broadcasted_iota(jnp.int32, h.shape, 0)
    mask = (row < n_valid).astype(h.dtype)                            # drop padded node rows
    acc_ref[...] += jnp.sum(h * mask, axis=0, keepdims=True)

    @pl.when(i == pl.num_programs(0) - 1)
    def _():
        out_ref[...] = acc_ref[...] * (1.0 / n_valid)


# ----------------------------------------------------------------------------- glue
def build_normalized_adjacency(edge_index, num_nodes):
    """Dense GCN-normalized adjacency D^-1/2 (A + I) D^-1/2 (PyG GCNConv default).

    Duplicate edges are summed (PyG sums per-edge messages); self loops are only added for
    nodes that do not already have one (add_remaining_self_loops semantics).
    """
    src, dst = edge_index[0], edge_index[1]
    a = jnp.zeros((num_nodes, num_nodes), jnp.float32)
    a = a.at[dst, src].add(1.0)                       # message flows src -> dst
    diag = jnp.diagonal(a)
    a = a + jnp.diag(jnp.where(diag > 0, 0.0, 1.0))   # add only missing self loops
    deg = jnp.sum(a, axis=1)
    d_inv_sqrt = jnp.where(deg > 0, 1.0 / jnp.sqrt(deg), 0.0)
    return a * d_inv_sqrt[:, None] * d_inv_sqrt[None, :]


def intra_gcn_forward(x, edge_index, params):
    n, f_in = x.shape
    f_hid = params["w1"].shape[1]
    f_out = params["w2"].shape[1]

    a_hat = build_normalized_adjacency(edge_index, n)

    # Tile / pad the node dimension. Padded rows/cols of A are zero (inert); padded node rows
    # are masked out of the mean pool.
    if n <= NODE_TILE:
        np_ = _round_up(n, 8)
        tm = tk = np_                      # single full-extent tile
    else:
        tm = tk = NODE_TILE
        np_ = _round_up(n, NODE_TILE)
    n_i, n_k = np_ // tm, np_ // tk

    a_p = jnp.zeros((np_, np_), jnp.float32).at[:n, :n].set(a_hat).astype(jnp.bfloat16)
    x_p = jnp.zeros((np_, f_in), jnp.float32).at[:n, :].set(x.astype(jnp.float32))
    w1 = params["w1"].astype(jnp.bfloat16)
    w2 = params["w2"].astype(jnp.bfloat16)

    full = lambda shape: pl.BlockSpec(shape, lambda i, k: (0, 0))     # small resident operands
    layer_cparams = pltpu.CompilerParams(
        dimension_semantics=("parallel", "arbitrary"),                # row-tiles across TCs (v7x), K reduction
        vmem_limit_bytes=VMEM_LIMIT)

    # ---- layer 1: z = LN1(relu((A @ LN0(x)) @ W1 + b1)) @ W2 ----
    z = pl.pallas_call(
        _layer1_kernel,
        out_shape=jax.ShapeDtypeStruct((np_, f_out), jnp.float32),
        grid_spec=pltpu.PrefetchScalarGridSpec(
            num_scalar_prefetch=0,
            grid=(n_i, n_k),
            in_specs=[
                pl.BlockSpec((tm, tk), lambda i, k: (i, k)),          # A_hat tile (bf16)
                pl.BlockSpec((tk, f_in), lambda i, k: (k, 0)),        # x source-node tile (f32)
                full((1, f_in)), full((1, f_in)),                     # g0, b0
                full((f_in, f_hid)), full((1, f_hid)),                # W1 (bf16), bias1
                full((1, f_hid)), full((1, f_hid)),                   # g1, b1
                full((f_hid, f_out)),                                 # W2 (bf16, pre-applied)
            ],
            out_specs=pl.BlockSpec((tm, f_out), lambda i, k: (i, 0)),
            scratch_shapes=[pltpu.VMEM((tm, f_in), jnp.float32)],
        ),
        compiler_params=layer_cparams,
        cost_estimate=pl.CostEstimate(
            flops=2 * np_ * np_ * f_in + 2 * np_ * f_in * f_hid + 2 * np_ * f_hid * f_out,
            transcendentals=2 * np_,
            bytes_accessed=np_ * np_ * 2 + np_ * (f_in + f_out) * 4),
    )(a_p, x_p,
      params["g0"], params["b0"], w1, params["bias1"], params["g1"], params["b1"], w2)

    # ---- layer 2: h2 = LN2(relu(A @ z + b2)) ----
    h2 = pl.pallas_call(
        _layer2_kernel,
        out_shape=jax.ShapeDtypeStruct((np_, f_out), jnp.float32),
        grid_spec=pltpu.PrefetchScalarGridSpec(
            num_scalar_prefetch=0,
            grid=(n_i, n_k),
            in_specs=[
                pl.BlockSpec((tm, tk), lambda i, k: (i, k)),          # A_hat tile (bf16)
                pl.BlockSpec((tk, f_out), lambda i, k: (k, 0)),       # z source-node tile (f32)
                full((1, f_out)), full((1, f_out)), full((1, f_out)), # bias2, g2, b2
            ],
            out_specs=pl.BlockSpec((tm, f_out), lambda i, k: (i, 0)),
            scratch_shapes=[pltpu.VMEM((tm, f_out), jnp.float32)],
        ),
        compiler_params=layer_cparams,
        cost_estimate=pl.CostEstimate(
            flops=2 * np_ * np_ * f_out,
            transcendentals=np_,
            bytes_accessed=np_ * np_ * 2 + 2 * np_ * f_out * 4),
    )(a_p, z, params["bias2"], params["g2"], params["b2"])

    # ---- global_mean_pool over the real (unpadded) nodes -> [1, f_out] ----
    fea = pl.pallas_call(
        functools.partial(_mean_pool_kernel, tm=tm, n_valid=n),
        out_shape=jax.ShapeDtypeStruct((1, f_out), jnp.float32),
        grid_spec=pltpu.PrefetchScalarGridSpec(
            num_scalar_prefetch=0,
            grid=(n_i,),
            in_specs=[pl.BlockSpec((tm, f_out), lambda i: (i, 0))],
            out_specs=pl.BlockSpec((1, f_out), lambda i: (0, 0)),
            scratch_shapes=[pltpu.VMEM((1, f_out), jnp.float32)],
        ),
        compiler_params=pltpu.CompilerParams(
            dimension_semantics=("arbitrary",),
            vmem_limit_bytes=VMEM_LIMIT),
        cost_estimate=pl.CostEstimate(
            flops=2 * np_ * f_out,
            transcendentals=0,
            bytes_accessed=np_ * f_out * 4 + f_out * 4),
    )(h2)

    return fea


def init_params(key, in_feats, n_hidden, out_feats):
    ks = jax.random.split(key, 2)
    scale1 = 1.0 / jnp.sqrt(in_feats)
    scale2 = 1.0 / jnp.sqrt(n_hidden)
    return {
        # input LayerNorm
        "g0": jnp.ones((1, in_feats), jnp.float32),
        "b0": jnp.zeros((1, in_feats), jnp.float32),
        # GCNConv 1
        "w1": jax.random.uniform(ks[0], (in_feats, n_hidden), jnp.float32, -scale1, scale1),
        "bias1": jnp.zeros((1, n_hidden), jnp.float32),
        # LayerNorm after conv1
        "g1": jnp.ones((1, n_hidden), jnp.float32),
        "b1": jnp.zeros((1, n_hidden), jnp.float32),
        # GCNConv 2
        "w2": jax.random.uniform(ks[1], (n_hidden, out_feats), jnp.float32, -scale2, scale2),
        "bias2": jnp.zeros((1, out_feats), jnp.float32),
        # LayerNorm after conv2
        "g2": jnp.ones((1, out_feats), jnp.float32),
        "b2": jnp.zeros((1, out_feats), jnp.float32),
    }


if __name__ == "__main__":
    # Small shapes consistent with the module: one graph with N nodes.
    N, IN_FEATS, N_HIDDEN, OUT_FEATS = 8, 16, 32, 16

    key = jax.random.PRNGKey(0)
    k_x, k_p = jax.random.split(key)

    # node features [N, in_feats]
    x = jax.random.normal(k_x, (N, IN_FEATS), jnp.float32)

    # bidirectional ring graph: edge_index [2, E]
    src = jnp.arange(N, dtype=jnp.int32)
    dst = (src + 1) % N
    edge_index = jnp.stack(
        [jnp.concatenate([src, dst]), jnp.concatenate([dst, src])], axis=0)

    params = init_params(k_p, IN_FEATS, N_HIDDEN, OUT_FEATS)

    fea = jax.jit(intra_gcn_forward)(x, edge_index, params)
    jax.block_until_ready(fea)

    assert fea.shape == (1, OUT_FEATS)
    assert bool(jnp.all(jnp.isfinite(fea)))
    print("KERNEL_OK")
</pallas_src>

<mosaic_0001>
module attributes {stable_mosaic.version = 11 : i64} {
  func.func private @main(%arg0: i32) attributes {dimension_semantics = [#tpu.dimension_semantics<core_parallel>], iteration_bounds = array<i64: 2>, tpu.core_type = #tpu.core_type<sc_scalar_subcore>, window_params = []} {
    return
  }
}

module attributes {stable_mosaic.version = 11 : i64} {
  func.func private @main(%arg0: i32) attributes {dimension_semantics = [#tpu.dimension_semantics<core_parallel>], iteration_bounds = array<i64: 2>, tpu.core_type = #tpu.core_type<sc_scalar_subcore>, window_params = []} {
    return
  }
}

module attributes {stable_mosaic.version = 11 : i64} {
  func.func @_layer2_kernel(%arg0: i32, %arg1: i32, %arg2: memref<8x8xbf16, #tpu.memory_space<vmem>>, %arg3: memref<8x16xf32, #tpu.memory_space<vmem>>, %arg4: memref<1x16xf32, #tpu.memory_space<vmem>>, %arg5: memref<1x16xf32, #tpu.memory_space<vmem>>, %arg6: memref<1x16xf32, #tpu.memory_space<vmem>>, %arg7: memref<8x16xf32, #tpu.memory_space<vmem>>, %arg8: memref<8x16xf32, #tpu.memory_space<vmem>>) attributes {dimension_semantics = [#tpu.dimension_semantics<parallel>, #tpu.dimension_semantics<arbitrary>], iteration_bounds = array<i64: 1, 1>, scalar_prefetch = 0 : i64, scratch_operands = 1 : i64, tpu.core_type = #tpu.core_type<tc>, window_params = [{transform_indices = @transform_0, window_bounds = array<i64: 8, 8>}, {transform_indices = @transform_1, window_bounds = array<i64: 8, 16>}, {pipeline_mode = #tpu.pipeline_mode<synchronous>, transform_indices = @transform_2, window_bounds = array<i64: 1, 16>}, {pipeline_mode = #tpu.pipeline_mode<synchronous>, transform_indices = @transform_3, window_bounds = array<i64: 1, 16>}, {pipeline_mode = #tpu.pipeline_mode<synchronous>, transform_indices = @transform_4, window_bounds = array<i64: 1, 16>}, {transform_indices = @transform_5, window_bounds = array<i64: 8, 16>}]} {
    %c0_i32 = arith.constant 0 : i32
    %0 = arith.cmpi eq, %arg1, %c0_i32 : i32
    %1 = arith.extui %0 : i1 to i32
    %c0_i32_0 = arith.constant 0 : i32
    %2 = arith.cmpi ne, %1, %c0_i32_0 : i32
    scf.if %2 {
      %cst_10 = arith.constant 0.000000e+00 : f32
      %13 = vector.broadcast %cst_10 : f32 to vector<8x16xf32>
      %c0_11 = arith.constant 0 : index
      %c0_12 = arith.constant 0 : index
      %14 = vector.load %arg8[%c0_11, %c0_12] : memref<8x16xf32, #tpu.memory_space<vmem>>, vector<8x16xf32>
      tpu.vector_store %arg8[%c0_11, %c0_12], %13 {strides = array<i32>} : memref<8x16xf32, #tpu.memory_space<vmem>>, vector<8x16xf32>,
    } else {
    }
    %c0 = arith.constant 0 : index
    %c0_1 = arith.constant 0 : index
    %3 = vector.load %arg8[%c0, %c0_1] : memref<8x16xf32, #tpu.memory_space<vmem>>, vector<8x16xf32>
    %c0_2 = arith.constant 0 : index
    %c0_3 = arith.constant 0 : index
    %4 = vector.load %arg2[%c0_2, %c0_3] : memref<8x8xbf16, #tpu.memory_space<vmem>>, vector<8x8xbf16>
    %c0_4 = arith.constant 0 : index
    %c0_5 = arith.constant 0 : index
    %5 = vector.load %arg3[%c0_4, %c0_5] : memref<8x16xf32, #tpu.memory_space<vmem>>, vector<8x16xf32>
    %6 = arith.truncf %5 : vector<8x16xf32> to vector<8x16xbf16>
    %cst = arith.constant dense<0.000000e+00> : vector<8x16xf32>
    %7 = tpu.matmul %4, %6, %cst {dimension_numbers = #tpu.dot_dimension_numbers<[1], [0], [0], [1], [0, 0, 1, 1], [], []>} : vector<8x8xbf16>, vector<8x16xbf16>, vector<8x16xf32> -> vector<8x16xf32>
    %8 = arith.addf %3, %7 : vector<8x16xf32>
    %c0_6 = arith.constant 0 : index
    %c0_7 = arith.constant 0 : index
    %9 = vector.load %arg8[%c0_6, %c0_7] : memref<8x16xf32, #tpu.memory_space<vmem>>, vector<8x16xf32>
    tpu.vector_store %arg8[%c0_6, %c0_7], %8 {strides = array<i32>} : memref<8x16xf32, #tpu.memory_space<vmem>>, vector<8x16xf32>,
    %c0_i32_8 = arith.constant 0 : i32
    %10 = arith.cmpi eq, %arg1, %c0_i32_8 : i32
    %11 = arith.extui %10 : i1 to i32
    %c0_i32_9 = arith.constant 0 : i32
    %12 = arith.cmpi ne, %11, %c0_i32_9 : i32
    scf.if %12 {
      %c0_10 = arith.constant 0 : index
      %c0_11 = arith.constant 0 : index
      %13 = vector.load %arg8[%c0_10, %c0_11] : memref<8x16xf32, #tpu.memory_space<vmem>>, vector<8x16xf32>
      %c0_12 = arith.constant 0 : index
      %c0_13 = arith.constant 0 : index
      %14 = vector.load %arg4[%c0_12, %c0_13] : memref<1x16xf32, #tpu.memory_space<vmem>>, vector<1x16xf32>
      %15 = vector.broadcast %14 : vector<1x16xf32> to vector<8x16xf32>
      %16 = arith.addf %13, %15 : vector<8x16xf32>
      %cst_14 = arith.constant 0.000000e+00 : f32
      %17 = vector.broadcast %cst_14 : f32 to vector<8x16xf32>
      %18 = arith.maximumf %16, %17 : vector<8x16xf32>
      %c0_15 = arith.constant 0 : index
      %c0_16 = arith.constant 0 : index
      %19 = vector.load %arg5[%c0_15, %c0_16] : memref<1x16xf32, #tpu.memory_space<vmem>>, vector<1x16xf32>
      %c0_17 = arith.constant 0 : index
      %c0_18 = arith.constant 0 : index
      %20 = vector.load %arg6[%c0_17, %c0_18] : memref<1x16xf32, #tpu.memory_space<vmem>>, vector<1x16xf32>
      %cst_19 = arith.constant dense<0.000000e+00> : vector<8xf32>
      %21 = vector.multi_reduction <add>, %18, %cst_19 [1] : vector<8x16xf32> to vector<8xf32>
      %22 = vector.shape_cast %21 : vector<8xf32> to vector<8x1xf32>
      %cst_20 = arith.constant 1.600000e+01 : f32
      %23 = vector.broadcast %cst_20 : f32 to vector<8x1xf32>
      %24 = arith.divf %22, %23 : vector<8x1xf32>
      %25 = vector.broadcast %24 : vector<8x1xf32> to vector<8x16xf32>
      %26 = arith.subf %18, %25 : vector<8x16xf32>
      %27 = arith.mulf %26, %26 : vector<8x16xf32>
      %cst_21 = arith.constant dense<0.000000e+00> : vector<8xf32>
      %28 = vector.multi_reduction <add>, %27, %cst_21 [1] : vector<8x16xf32> to vector<8xf32>
      %29 = vector.shape_cast %28 : vector<8xf32> to vector<8x1xf32>
      %cst_22 = arith.constant 1.600000e+01 : f32
      %30 = vector.broadcast %cst_22 : f32 to vector<8x1xf32>
      %31 = arith.divf %29, %30 : vector<8x1xf32>
      %32 = vector.broadcast %24 : vector<8x1xf32> to vector<8x16xf32>
      %33 = arith.subf %18, %32 : vector<8x16xf32>
      %cst_23 = arith.constant 9.99999974E-6 : f32
      %34 = vector.broadcast %cst_23 : f32 to vector<8x1xf32>
      %35 = arith.addf %31, %34 : vector<8x1xf32>
      %36 = math.rsqrt %35 : vector<8x1xf32>
      %37 = vector.broadcast %36 : vector<8x1xf32> to vector<8x16xf32>
      %38 = arith.mulf %33, %37 : vector<8x16xf32>
      %39 = vector.broadcast %19 : vector<1x16xf32> to vector<8x16xf32>
      %40 = arith.mulf %38, %39 : vector<8x16xf32>
      %41 = vector.broadcast %20 : vector<1x16xf32> to vector<8x16xf32>
      %42 = arith.addf %40, %41 : vector<8x16xf32>
      %c0_24 = arith.constant 0 : index
      %c0_25 = arith.constant 0 : index
      %43 = vector.load %arg7[%c0_24, %c0_25] : memref<8x16xf32, #tpu.memory_space<vmem>>, vector<8x16xf32>
      tpu.vector_store %arg7[%c0_24, %c0_25], %42 {strides = array<i32>} : memref<8x16xf32, #tpu.memory_space<vmem>>, vector<8x16xf32>,
    } else {
    }
    return
  }
  func.func @transform_0(%arg0: i32, %arg1: i32) -> (i32, i32) {
    %c0_i32 = arith.constant 0 : i32
    return %arg0, %arg1 : i32, i32
  }
  func.func @transform_1(%arg0: i32, %arg1: i32) -> (i32, i32) {
    %c0_i32 = arith.constant 0 : i32
    %c0_i32_0 = arith.constant 0 : i32
    return %arg1, %c0_i32 : i32, i32
  }
  func.func @transform_2(%arg0: i32, %arg1: i32) -> (i32, i32) {
    %c0_i32 = arith.constant 0 : i32
    %c0_i32_0 = arith.constant 0 : i32
    %c0_i32_1 = arith.constant 0 : i32
    return %c0_i32, %c0_i32_0 : i32, i32
  }
  func.func @transform_3(%arg0: i32, %arg1: i32) -> (i32, i32) {
    %c0_i32 = arith.constant 0 : i32
    %c0_i32_0 = arith.constant 0 : i32
    %c0_i32_1 = arith.constant 0 : i32
    return %c0_i32, %c0_i32_0 : i32, i32
  }
  func.func @transform_4(%arg0: i32, %arg1: i32) -> (i32, i32) {
    %c0_i32 = arith.constant 0 : i32
    %c0_i32_0 = arith.constant 0 : i32
    %c0_i32_1 = arith.constant 0 : i32
    return %c0_i32, %c0_i32_0 : i32, i32
  }
  func.func @transform_5(%arg0: i32, %arg1: i32) -> (i32, i32) {
    %c0_i32 = arith.constant 0 : i32
    %c0_i32_0 = arith.constant 0 : i32
    return %arg0, %c0_i32 : i32, i32
  }
}

module attributes {stable_mosaic.version = 11 : i64} {
  func.func @_layer1_kernel(%arg0: i32, %arg1: i32, %arg2: memref<8x8xbf16, #tpu.memory_space<vmem>>, %arg3: memref<8x16xf32, #tpu.memory_space<vmem>>, %arg4: memref<1x16xf32, #tpu.memory_space<vmem>>, %arg5: memref<1x16xf32, #tpu.memory_space<vmem>>, %arg6: memref<16x32xbf16, #tpu.memory_space<vmem>>, %arg7: memref<1x32xf32, #tpu.memory_space<vmem>>, %arg8: memref<1x32xf32, #tpu.memory_space<vmem>>, %arg9: memref<1x32xf32, #tpu.memory_space<vmem>>, %arg10: memref<32x16xbf16, #tpu.memory_space<vmem>>, %arg11: memref<8x16xf32, #tpu.memory_space<vmem>>, %arg12: memref<8x16xf32, #tpu.memory_space<vmem>>) attributes {dimension_semantics = [#tpu.dimension_semantics<parallel>, #tpu.dimension_semantics<arbitrary>], iteration_bounds = array<i64: 1, 1>, scalar_prefetch = 0 : i64, scratch_operands = 1 : i64, tpu.core_type = #tpu.core_type<tc>, window_params = [{transform_indices = @transform_0, window_bounds = array<i64: 8, 8>}, {transform_indices = @transform_1, window_bounds = array<i64: 8, 16>}, {pipeline_mode = #tpu.pipeline_mode<synchronous>, transform_indices = @transform_2, window_bounds = array<i64: 1, 16>}, {pipeline_mode = #tpu.pipeline_mode<synchronous>, transform_indices = @transform_3, window_bounds = array<i64: 1, 16>}, {pipeline_mode = #tpu.pipeline_mode<synchronous>, transform_indices = @transform_4, window_bounds = array<i64: 16, 32>}, {pipeline_mode = #tpu.pipeline_mode<synchronous>, transform_indices = @transform_5, window_bounds = array<i64: 1, 32>}, {pipeline_mode = #tpu.pipeline_mode<synchronous>, transform_indices = @transform_6, window_bounds = array<i64: 1, 32>}, {pipeline_mode = #tpu.pipeline_mode<synchronous>, transform_indices = @transform_7, window_bounds = array<i64: 1, 32>}, {pipeline_mode = #tpu.pipeline_mode<synchronous>, transform_indices = @transform_8, window_bounds = array<i64: 32, 16>}, {transform_indices = @transform_9, window_bounds = array<i64: 8, 16>}]} {
    %c0_i32 = arith.constant 0 : i32
    %0 = arith.cmpi eq, %arg1, %c0_i32 : i32
    %1 = arith.extui %0 : i1 to i32
    %c0_i32_0 = arith.constant 0 : i32
    %2 = arith.cmpi ne, %1, %c0_i32_0 : i32
    scf.if %2 {
      %cst_19 = arith.constant 0.000000e+00 : f32
      %37 = vector.broadcast %cst_19 : f32 to vector<8x16xf32>
      %c0_20 = arith.constant 0 : index
      %c0_21 = arith.constant 0 : index
      %38 = vector.load %arg12[%c0_20, %c0_21] : memref<8x16xf32, #tpu.memory_space<vmem>>, vector<8x16xf32>
      tpu.vector_store %arg12[%c0_20, %c0_21], %37 {strides = array<i32>} : memref<8x16xf32, #tpu.memory_space<vmem>>, vector<8x16xf32>,
    } else {
    }
    %c0 = arith.constant 0 : index
    %c0_1 = arith.constant 0 : index
    %3 = vector.load %arg3[%c0, %c0_1] : memref<8x16xf32, #tpu.memory_space<vmem>>, vector<8x16xf32>
    %c0_2 = arith.constant 0 : index
    %c0_3 = arith.constant 0 : index
    %4 = vector.load %arg4[%c0_2, %c0_3] : memref<1x16xf32, #tpu.memory_space<vmem>>, vector<1x16xf32>
    %c0_4 = arith.constant 0 : index
    %c0_5 = arith.constant 0 : index
    %5 = vector.load %arg5[%c0_4, %c0_5] : memref<1x16xf32, #tpu.memory_space<vmem>>, vector<1x16xf32>
    %cst = arith.constant dense<0.000000e+00> : vector<8xf32>
    %6 = vector.multi_reduction <add>, %3, %cst [1] : vector<8x16xf32> to vector<8xf32>
    %7 = vector.shape_cast %6 : vector<8xf32> to vector<8x1xf32>
    %cst_6 = arith.constant 1.600000e+01 : f32
    %8 = vector.broadcast %cst_6 : f32 to vector<8x1xf32>
    %9 = arith.divf %7, %8 : vector<8x1xf32>
    %10 = vector.broadcast %9 : vector<8x1xf32> to vector<8x16xf32>
    %11 = arith.subf %3, %10 : vector<8x16xf32>
    %12 = arith.mulf %11, %11 : vector<8x16xf32>
    %cst_7 = arith.constant dense<0.000000e+00> : vector<8xf32>
    %13 = vector.multi_reduction <add>, %12, %cst_7 [1] : vector<8x16xf32> to vector<8xf32>
    %14 = vector.shape_cast %13 : vector<8xf32> to vector<8x1xf32>
    %cst_8 = arith.constant 1.600000e+01 : f32
    %15 = vector.broadcast %cst_8 : f32 to vector<8x1xf32>
    %16 = arith.divf %14, %15 : vector<8x1xf32>
    %17 = vector.broadcast %9 : vector<8x1xf32> to vector<8x16xf32>
    %18 = arith.subf %3, %17 : vector<8x16xf32>
    %cst_9 = arith.constant 9.99999974E-6 : f32
    %19 = vector.broadcast %cst_9 : f32 to vector<8x1xf32>
    %20 = arith.addf %16, %19 : vector<8x1xf32>
    %21 = math.rsqrt %20 : vector<8x1xf32>
    %22 = vector.broadcast %21 : vector<8x1xf32> to vector<8x16xf32>
    %23 = arith.mulf %18, %22 : vector<8x16xf32>
    %24 = vector.broadcast %4 : vector<1x16xf32> to vector<8x16xf32>
    %25 = arith.mulf %23, %24 : vector<8x16xf32>
    %26 = vector.broadcast %5 : vector<1x16xf32> to vector<8x16xf32>
    %27 = arith.addf %25, %26 : vector<8x16xf32>
    %c0_10 = arith.constant 0 : index
    %c0_11 = arith.constant 0 : index
    %28 = vector.load %arg12[%c0_10, %c0_11] : memref<8x16xf32, #tpu.memory_space<vmem>>, vector<8x16xf32>
    %c0_12 = arith.constant 0 : index
    %c0_13 = arith.constant 0 : index
    %29 = vector.load %arg2[%c0_12, %c0_13] : memref<8x8xbf16, #tpu.memory_space<vmem>>, vector<8x8xbf16>
    %30 = arith.truncf %27 : vector<8x16xf32> to vector<8x16xbf16>
    %cst_14 = arith.constant dense<0.000000e+00> : vector<8x16xf32>
    %31 = tpu.matmul %29, %30, %cst_14 {dimension_numbers = #tpu.dot_dimension_numbers<[1], [0], [0], [1], [0, 0, 1, 1], [], []>} : vector<8x8xbf16>, vector<8x16xbf16>, vector<8x16xf32> -> vector<8x16xf32>
    %32 = arith.addf %28, %31 : vector<8x16xf32>
    %c0_15 = arith.constant 0 : index
    %c0_16 = arith.constant 0 : index
    %33 = vector.load %arg12[%c0_15, %c0_16] : memref<8x16xf32, #tpu.memory_space<vmem>>, vector<8x16xf32>
    tpu.vector_store %arg12[%c0_15, %c0_16], %32 {strides = array<i32>} : memref<8x16xf32, #tpu.memory_space<vmem>>, vector<8x16xf32>,
    %c0_i32_17 = arith.constant 0 : i32
    %34 = arith.cmpi eq, %arg1, %c0_i32_17 : i32
    %35 = arith.extui %34 : i1 to i32
    %c0_i32_18 = arith.constant 0 : i32
    %36 = arith.cmpi ne, %35, %c0_i32_18 : i32
    scf.if %36 {
      %c0_19 = arith.constant 0 : index
      %c0_20 = arith.constant 0 : index
      %37 = vector.load %arg12[%c0_19, %c0_20] : memref<8x16xf32, #tpu.memory_space<vmem>>, vector<8x16xf32>
      %38 = arith.truncf %37 : vector<8x16xf32> to vector<8x16xbf16>
      %c0_21 = arith.constant 0 : index
      %c0_22 = arith.constant 0 : index
      %39 = vector.load %arg6[%c0_21, %c0_22] : memref<16x32xbf16, #tpu.memory_space<vmem>>, vector<16x32xbf16>
      %cst_23 = arith.constant dense<0.000000e+00> : vector<8x32xf32>
      %40 = tpu.matmul %38, %39, %cst_23 {dimension_numbers = #tpu.dot_dimension_numbers<[1], [0], [0], [1], [0, 0, 1, 1], [], []>} : vector<8x16xbf16>, vector<16x32xbf16>, vector<8x32xf32> -> vector<8x32xf32>
      %c0_24 = arith.constant 0 : index
      %c0_25 = arith.constant 0 : index
      %41 = vector.load %arg7[%c0_24, %c0_25] : memref<1x32xf32, #tpu.memory_space<vmem>>, vector<1x32xf32>
      %42 = vector.broadcast %41 : vector<1x32xf32> to vector<8x32xf32>
      %43 = arith.addf %40, %42 : vector<8x32xf32>
      %cst_26 = arith.constant 0.000000e+00 : f32
      %44 = vector.broadcast %cst_26 : f32 to vector<8x32xf32>
      %45 = arith.maximumf %43, %44 : vector<8x32xf32>
      %c0_27 = arith.constant 0 : index
      %c0_28 = arith.constant 0 : index
      %46 = vector.load %arg8[%c0_27, %c0_28] : memref<1x32xf32, #tpu.memory_space<vmem>>, vector<1x32xf32>
      %c0_29 = arith.constant 0 : index
      %c0_30 = arith.constant 0 : index
      %47 = vector.load %arg9[%c0_29, %c0_30] : memref<1x32xf32, #tpu.memory_space<vmem>>, vector<1x32xf32>
      %cst_31 = arith.constant dense<0.000000e+00> : vector<8xf32>
      %48 = vector.multi_reduction <add>, %45, %cst_31 [1] : vector<8x32xf32> to vector<8xf32>
      %49 = vector.shape_cast %48 : vector<8xf32> to vector<8x1xf32>
      %cst_32 = arith.constant 3.200000e+01 : f32
      %50 = vector.broadcast %cst_32 : f32 to vector<8x1xf32>
      %51 = arith.divf %49, %50 : vector<8x1xf32>
      %52 = vector.broadcast %51 : vector<8x1xf32> to vector<8x32xf32>
      %53 = arith.subf %45, %52 : vector<8x32xf32>
      %54 = arith.mulf %53, %53 : vector<8x32xf32>
      %cst_33 = arith.constant dense<0.000000e+00> : vector<8xf32>
      %55 = vector.multi_reduction <add>, %54, %cst_33 [1] : vector<8x32xf32> to vector<8xf32>
      %56 = vector.shape_cast %55 : vector<8xf32> to vector<8x1xf32>
      %cst_34 = arith.constant 3.200000e+01 : f32
      %57 = vector.broadcast %cst_34 : f32 to vector<8x1xf32>
      %58 = arith.divf %56, %57 : vector<8x1xf32>
      %59 = vector.broadcast %51 : vector<8x1xf32> to vector<8x32xf32>
      %60 = arith.subf %45, %59 : vector<8x32xf32>
      %cst_35 = arith.constant 9.99999974E-6 : f32
      %61 = vector.broadcast %cst_35 : f32 to vector<8x1xf32>
      %62 = arith.addf %58, %61 : vector<8x1xf32>
      %63 = math.rsqrt %62 : vector<8x1xf32>
      %64 = vector.broadcast %63 : vector<8x1xf32> to vector<8x32xf32>
      %65 = arith.mulf %60, %64 : vector<8x32xf32>
      %66 = vector.broadcast %46 : vector<1x32xf32> to vector<8x32xf32>
      %67 = arith.mulf %65, %66 : vector<8x32xf32>
      %68 = vector.broadcast %47 : vector<1x32xf32> to vector<8x32xf32>
      %69 = arith.addf %67, %68 : vector<8x32xf32>
      %70 = arith.truncf %69 : vector<8x32xf32> to vector<8x32xbf16>
      %c0_36 = arith.constant 0 : index
      %c0_37 = arith.constant 0 : index
      %71 = vector.load %arg10[%c0_36, %c0_37] : memref<32x16xbf16, #tpu.memory_space<vmem>>, vector<32x16xbf16>
      %cst_38 = arith.constant dense<0.000000e+00> : vector<8x16xf32>
      %72 = tpu.matmul %70, %71, %cst_38 {dimension_numbers = #tpu.dot_dimension_numbers<[1], [0], [0], [1], [0, 0, 1, 1], [], []>} : vector<8x32xbf16>, vector<32x16xbf16>, vector<8x16xf32> -> vector<8x16xf32>
      %c0_39 = arith.constant 0 : index
      %c0_40 = arith.constant 0 : index
      %73 = vector.load %arg11[%c0_39, %c0_40] : memref<8x16xf32, #tpu.memory_space<vmem>>, vector<8x16xf32>
      tpu.vector_store %arg11[%c0_39, %c0_40], %72 {strides = array<i32>} : memref<8x16xf32, #tpu.memory_space<vmem>>, vector<8x16xf32>,
    } else {
    }
    return
  }
  func.func @transform_0(%arg0: i32, %arg1: i32) -> (i32, i32) {
    %c0_i32 = arith.constant 0 : i32
    return %arg0, %arg1 : i32, i32
  }
  func.func @transform_1(%arg0: i32, %arg1: i32) -> (i32, i32) {
    %c0_i32 = arith.constant 0 : i32
    %c0_i32_0 = arith.constant 0 : i32
    return %arg1, %c0_i32 : i32, i32
  }
  func.func @transform_2(%arg0: i32, %arg1: i32) -> (i32, i32) {
    %c0_i32 = arith.constant 0 : i32
    %c0_i32_0 = arith.constant 0 : i32
    %c0_i32_1 = arith.constant 0 : i32
    return %c0_i32, %c0_i32_0 : i32, i32
  }
  func.func @transform_3(%arg0: i32, %arg1: i32) -> (i32, i32) {
    %c0_i32 = arith.constant 0 : i32
    %c0_i32_0 = arith.constant 0 : i32
    %c0_i32_1 = arith.constant 0 : i32
    return %c0_i32, %c0_i32_0 : i32, i32
  }
  func.func @transform_4(%arg0: i32, %arg1: i32) -> (i32, i32) {
    %c0_i32 = arith.constant 0 : i32
    %c0_i32_0 = arith.constant 0 : i32
    %c0_i32_1 = arith.constant 0 : i32
    return %c0_i32, %c0_i32_0 : i32, i32
  }
  func.func @transform_5(%arg0: i32, %arg1: i32) -> (i32, i32) {
    %c0_i32 = arith.constant 0 : i32
    %c0_i32_0 = arith.constant 0 : i32
    %c0_i32_1 = arith.constant 0 : i32
    return %c0_i32, %c0_i32_0 : i32, i32
  }
  func.func @transform_6(%arg0: i32, %arg1: i32) -> (i32, i32) {
    %c0_i32 = arith.constant 0 : i32
    %c0_i32_0 = arith.constant 0 : i32
    %c0_i32_1 = arith.constant 0 : i32
    return %c0_i32, %c0_i32_0 : i32, i32
  }
  func.func @transform_7(%arg0: i32, %arg1: i32) -> (i32, i32) {
    %c0_i32 = arith.constant 0 : i32
    %c0_i32_0 = arith.constant 0 : i32
    %c0_i32_1 = arith.constant 0 : i32
    return %c0_i32, %c0_i32_0 : i32, i32
  }
  func.func @transform_8(%arg0: i32, %arg1: i32) -> (i32, i32) {
    %c0_i32 = arith.constant 0 : i32
    %c0_i32_0 = arith.constant 0 : i32
    %c0_i32_1 = arith.constant 0 : i32
    return %c0_i32, %c0_i32_0 : i32, i32
  }
  func.func @transform_9(%arg0: i32, %arg1: i32) -> (i32, i32) {
    %c0_i32 = arith.constant 0 : i32
    %c0_i32_0 = arith.constant 0 : i32
    return %arg0, %c0_i32 : i32, i32
  }
}

module attributes {stable_mosaic.version = 11 : i64} {
  func.func @_mean_pool_kernel(%arg0: i32, %arg1: memref<8x16xf32, #tpu.memory_space<vmem>>, %arg2: memref<1x16xf32, #tpu.memory_space<vmem>>, %arg3: memref<1x16xf32, #tpu.memory_space<vmem>>) attributes {dimension_semantics = [#tpu.dimension_semantics<arbitrary>], iteration_bounds = array<i64: 1>, scalar_prefetch = 0 : i64, scratch_operands = 1 : i64, tpu.core_type = #tpu.core_type<tc>, window_params = [{transform_indices = @transform_0, window_bounds = array<i64: 8, 16>}, {pipeline_mode = #tpu.pipeline_mode<synchronous>, transform_indices = @transform_1, window_bounds = array<i64: 1, 16>}]} {
    %c0_i32 = arith.constant 0 : i32
    %0 = arith.cmpi eq, %arg0, %c0_i32 : i32
    %1 = arith.extui %0 : i1 to i32
    %c0_i32_0 = arith.constant 0 : i32
    %2 = arith.cmpi ne, %1, %c0_i32_0 : i32
    scf.if %2 {
      %cst_9 = arith.constant 0.000000e+00 : f32
      %21 = vector.broadcast %cst_9 : f32 to vector<1x16xf32>
      %c0_10 = arith.constant 0 : index
      %c0_11 = arith.constant 0 : index
      %22 = vector.load %arg3[%c0_10, %c0_11] : memref<1x16xf32, #tpu.memory_space<vmem>>, vector<1x16xf32>
      tpu.vector_store %arg3[%c0_10, %c0_11], %21 {strides = array<i32>} : memref<1x16xf32, #tpu.memory_space<vmem>>, vector<1x16xf32>,
    } else {
    }
    %c0 = arith.constant 0 : index
    %c0_1 = arith.constant 0 : index
    %3 = vector.load %arg1[%c0, %c0_1] : memref<8x16xf32, #tpu.memory_space<vmem>>, vector<8x16xf32>
    %c8_i32 = arith.constant 8 : i32
    %4 = arith.muli %arg0, %c8_i32 : i32
    %5 = tpu.iota {dimensions = array<i32: 0>} : vector<8x16xi32>
    %6 = vector.broadcast %4 : i32 to vector<8x16xi32>
    %7 = arith.addi %6, %5 : vector<8x16xi32>
    %c8_i32_2 = arith.constant 8 : i32
    %8 = vector.broadcast %c8_i32_2 : i32 to vector<8x16xi32>
    %9 = arith.cmpi slt, %7, %8 : vector<8x16xi32>
    %10 = arith.extui %9 : vector<8x16xi1> to vector<8x16xi32>
    %11 = arith.sitofp %10 : vector<8x16xi32> to vector<8x16xf32>
    %c0_3 = arith.constant 0 : index
    %c0_4 = arith.constant 0 : index
    %12 = vector.load %arg3[%c0_3, %c0_4] : memref<1x16xf32, #tpu.memory_space<vmem>>, vector<1x16xf32>
    %13 = arith.mulf %3, %11 : vector<8x16xf32>
    %cst = arith.constant dense<0.000000e+00> : vector<16xf32>
    %14 = vector.multi_reduction <add>, %13, %cst [0] : vector<8x16xf32> to vector<16xf32>
    %15 = vector.shape_cast %14 : vector<16xf32> to vector<1x16xf32>
    %16 = arith.addf %12, %15 : vector<1x16xf32>
    %c0_5 = arith.constant 0 : index
    %c0_6 = arith.constant 0 : index
    %17 = vector.load %arg3[%c0_5, %c0_6] : memref<1x16xf32, #tpu.memory_space<vmem>>, vector<1x16xf32>
    tpu.vector_store %arg3[%c0_5, %c0_6], %16 {strides = array<i32>} : memref<1x16xf32, #tpu.memory_space<vmem>>, vector<1x16xf32>,
    %c0_i32_7 = arith.constant 0 : i32
    %18 = arith.cmpi eq, %arg0, %c0_i32_7 : i32
    %19 = arith.extui %18 : i1 to i32
    %c0_i32_8 = arith.constant 0 : i32
    %20 = arith.cmpi ne, %19, %c0_i32_8 : i32
    scf.if %20 {
      %c0_9 = arith.constant 0 : index
      %c0_10 = arith.constant 0 : index
      %21 = vector.load %arg3[%c0_9, %c0_10] : memref<1x16xf32, #tpu.memory_space<vmem>>, vector<1x16xf32>
      %cst_11 = arith.constant 1.250000e-01 : f32
      %22 = vector.broadcast %cst_11 : f32 to vector<1x16xf32>
      %23 = arith.mulf %21, %22 : vector<1x16xf32>
      %c0_12 = arith.constant 0 : index
      %c0_13 = arith.constant 0 : index
      %24 = vector.load %arg2[%c0_12, %c0_13] : memref<1x16xf32, #tpu.memory_space<vmem>>, vector<1x16xf32>
      tpu.vector_store %arg2[%c0_12, %c0_13], %23 {strides = array<i32>} : memref<1x16xf32, #tpu.memory_space<vmem>>, vector<1x16xf32>,
    } else {
    }
    return
  }
  func.func @transform_0(%arg0: i32) -> (i32, i32) {
    %c0_i32 = arith.constant 0 : i32
    %c0_i32_0 = arith.constant 0 : i32
    return %arg0, %c0_i32 : i32, i32
  }
  func.func @transform_1(%arg0: i32) -> (i32, i32) {
    %c0_i32 = arith.constant 0 : i32
    %c0_i32_0 = arith.constant 0 : i32
    %c0_i32_1 = arith.constant 0 : i32
    return %c0_i32, %c0_i32_0 : i32, i32
  }
}

</mosaic_0001>

<llo_original>
// kernel: intra_gcn_forward.4
$region0: #{intra_gcn_forward.4}
  #allocation0 [shape = 'u32[]', space=smem, size = 0x4, offset = 0x4, fixed_abs, tag = 'smem constant byte address 0x4 - core index']
  #allocation1 [shape = 'u32[144,128]{1,0:T(1,128)}', space=vmem, size = 0x12000, scoped, tag = 'internal scratch']
  #allocation2 [shape = 'f32[8,16]{1,0:T(8,128)}', space=vmem, size = 0x1000, scoped, tag = 'scratch operand']
  %s0 = inlined_call_operand.vmem [shape: bf16[8,8], index: 0, kind: input, shape index: {}]
  %s1 = inlined_call_operand.vmem [shape: f32[8,16], index: 1, kind: input, shape index: {}]
  %s2 = inlined_call_operand.vmem [shape: f32[1,16], index: 2, kind: input, shape index: {}]
  %s3 = inlined_call_operand.vmem [shape: f32[1,16], index: 3, kind: input, shape index: {}]
  %s4 = inlined_call_operand.vmem [shape: f32[1,16], index: 4, kind: input, shape index: {}]
  %s5 = inlined_call_operand.vmem [shape: f32[8,16], index: 5, kind: output, shape index: {}]
  %s6 = sld [smem:[#allocation0]]
  $region38: #{intra_gcn_forward.4} parent=0
    _
  %s8 = ssub.s32 1, %s6
  %s9 = scalar_select 0, %s8, %s6
  // Predicated region
  $region2: #{intra_gcn_forward.4} parent=0 // pred_check
    _
  $region3: #{intra_gcn_forward.4} parent=0 // pred_check_branch
    %11 = sbr.rel (0) target = $region5
  $region4: #{intra_gcn_forward.4} parent=0 // pred_region
    _
  $region5: #{intra_gcn_forward.4} parent=0 // pred_fallthru
    _
  // Predicated region
  $region6: #{intra_gcn_forward.4} parent=0 // pred_check
    _
  $region7: #{intra_gcn_forward.4} parent=0 // pred_check_branch
    %13 = sbr.rel (0) target = $region9
  $region8: #{intra_gcn_forward.4} parent=0 // pred_region
    _
  $region9: #{intra_gcn_forward.4} parent=0 // pred_fallthru
    _
  // Predicated region
  $region10: #{intra_gcn_forward.4} parent=0 // pred_check
    _
  $region11: #{intra_gcn_forward.4} parent=0 // pred_check_branch
    %15 = sbr.rel (0) target = $region13
  $region12: #{intra_gcn_forward.4} parent=0 // pred_region
    _
  $region13: #{intra_gcn_forward.4} parent=0 // pred_fallthru
    _
  // Predicated region
  $region14: #{intra_gcn_forward.4} parent=0 // pred_check
    _
  $region15: #{intra_gcn_forward.4} parent=0 // pred_check_branch
    %17 = sbr.rel (0) target = $region17
  $region16: #{intra_gcn_forward.4} parent=0 // pred_region
    _
  $region17: #{intra_gcn_forward.4} parent=0 // pred_fallthru
    _
  // Predicated region
  $region18: #{intra_gcn_forward.4} parent=0 // pred_check
    _
  $region19: #{intra_gcn_forward.4} parent=0 // pred_check_branch
    %19 = sbr.rel (0) target = $region21
  $region20: #{intra_gcn_forward.4} parent=0 // pred_region
    _
  $region21: #{intra_gcn_forward.4} parent=0 // pred_fallthru
    _
  %p21 = scmp.eq.s32.totalorder 0, 0
  // Predicated region
  $region22: #{intra_gcn_forward.4} parent=0 // pred_check
    %p22 = pneg %p21
  $region23: #{intra_gcn_forward.4} parent=0 // pred_check_branch
    %24 = sbr.rel (%p22) target = $region25
  $region24: #{intra_gcn_forward.4} parent=0 // pred_region
    %vm25 = vcmask 130048
    %26 = vst.msk [vmem:[#allocation2] sm:$0xff] %vm25, 0.0
  $region25: #{intra_gcn_forward.4} parent=0 // pred_fallthru
    _
  %v27 = vld [vmem:[#allocation2] sm:$0xff]
  %v28 = vld [vmem:[%s0] sm:$0xf]
  %v29 = vld [vmem:[%s1] sm:$0xff]
  %v30 = vpack.c.bf16 %v29, %v29
  %vm31 = vcmask 64512
  %v33 = vsel %vm31, %v28, 0
  %vm35 = vcmask 1043456
  %v37 = vsel %vm35, %v30, 0
  %39 = vmatprep.subr.bf16.mxu0 0
  %40 = vmatpush1.bf16.msra.mxu0 %v37
  %41 = vmatprep.subr.bf16.mxu0 0
  %42 = vmatpush1.bf16.msra.mxu0 0
  %43 = vmatprep.subr.bf16.mxu0 0
  %44 = vmatpush1.bf16.msra.mxu0 0
  %45 = vmatprep.subr.bf16.mxu0 0
  %46 = vmatpush1.bf16.msra.mxu0 0
  %47 = vmatprep.subr.bf16.mxu0 0
  %48 = vmatpush1.bf16.msra.mxu0 0
  %49 = vmatprep.subr.bf16.mxu0 0
  %50 = vmatpush1.bf16.msra.mxu0 0
  %51 = vmatprep.subr.bf16.mxu0 0
  %52 = vmatpush1.bf16.msra.mxu0 0
  %53 = vmatprep.subr.bf16.mxu0 0
  %54 = vmatpush1.bf16.msra.mxu0 0
  %55 = vmatprep.subr.bf16.mxu0 0
  %56 = vmatpush1.bf16.msra.mxu0 0
  %57 = vmatprep.subr.bf16.mxu0 0
  %58 = vmatpush1.bf16.msra.mxu0 0
  %59 = vmatprep.subr.bf16.mxu0 0
  %60 = vmatpush1.bf16.msra.mxu0 0
  %61 = vmatprep.subr.bf16.mxu0 0
  %62 = vmatpush1.bf16.msra.mxu0 0
  %63 = vmatprep.subr.bf16.mxu0 0
  %64 = vmatpush1.bf16.msra.mxu0 0
  %65 = vmatprep.subr.bf16.mxu0 0
  %66 = vmatpush1.bf16.msra.mxu0 0
  %67 = vmatprep.subr.bf16.mxu0 0
  %68 = vmatpush1.bf16.msra.mxu0 0
  %69 = vmatprep.subr.bf16.mxu0 0
  %70 = vmatpush1.bf16.msra.mxu0 0
  %71 = vmatprep.mubr.bf16.mxu0 0
  %72 = vmatmul.mubr.bf16.gmra.mrb[0].mxu0 %v33
  %v73 = vpop.f32.mrb[0].mxu0
  %v74 = vadd.f32 0.0, %v73
  %v75 = vpop.f32.mrb[0].mxu0
  %v76 = vpop.f32.mrb[0].mxu0
  %v77 = vpop.f32.mrb[0].mxu0
  %78 = vdwg.mxu0
  %v79 = vadd.f32 %v27, %v74
  %vm80 = vcmask 130048
  %81 = vst.msk [vmem:[#allocation2] sm:$0xff] %vm80, %v79
  // Predicated region
  $region26: #{intra_gcn_forward.4} parent=0 // pred_check
    %p82 = pneg %p21
  $region27: #{intra_gcn_forward.4} parent=0 // pred_check_branch
    %84 = sbr.rel (%p82) target = $region29
  $region28: #{intra_gcn_forward.4} parent=0 // pred_region
    %v85 = vld [vmem:[#allocation2] sm:$0xff]
    %v86 = vld [vmem:[%s2] sm:$0x1]
    %v88 = vlaneseq
    %v89 = vshrl.u32 %v88, 7
    %v90 = vsub.s32 0, %v89
    %v91 = vrot.slane %v86, %v90
    %v93 = vadd.f32 %v85, %v91
    %v94 = vmax.f32 %v93, 0.0
    %v95 = vld [vmem:[%s3] sm:$0x1]
    %v96 = vld [vmem:[%s4] sm:$0x1]
    %v97 = vsel %vm80, %v94, 0.0
    %98 = vadd.xlane.f32.xlu0 %v97
    %v99 = vpop.xlane.xlu0 %98
    %v100 = vrcp.pop 16.0
    %v101 = vmul.f32 %v99, %v100
    %v102 = vsub.f32 %v94, %v101
    %v103 = vmul.f32 %v102, %v102
    %v104 = vsel %vm80, %v103, 0.0
    %105 = vadd.xlane.f32.xlu0 %v104
    %v106 = vpop.xlane.xlu0 %105
    %v107 = vmul.f32 %v106, %v100
    %v108 = vadd.f32 %v107, 1e-05
    %v109 = vrsqrt.pop %v108
    %v110 = vmul.f32 %v102, %v109
    %v112 = vlaneseq
    %v113 = vshrl.u32 %v112, 7
    %v114 = vsub.s32 0, %v113
    %v115 = vrot.slane %v95, %v114
    %v117 = vmul.f32 %v110, %v115
    %v119 = vlaneseq
    %v120 = vshrl.u32 %v119, 7
    %v121 = vsub.s32 0, %v120
    %v122 = vrot.slane %v96, %v121
    %v124 = vadd.f32 %v117, %v122
    %125 = vst.msk [vmem:[%s5] sm:$0xff] %vm80, %v124
  $region29: #{intra_gcn_forward.4} parent=0 // pred_fallthru
    _
  // Predicated region
  $region30: #{intra_gcn_forward.4} parent=0 // pred_check
    _
  $region31: #{intra_gcn_forward.4} parent=0 // pred_check_branch
    %127 = sbr.rel (0) target = $region33
  $region32: #{intra_gcn_forward.4} parent=0 // pred_region
    _
  $region33: #{intra_gcn_forward.4} parent=0 // pred_fallthru
    _
  // Predicated region
  $region34: #{intra_gcn_forward.4} parent=0 // pred_check
    _
  $region35: #{intra_gcn_forward.4} parent=0 // pred_check_branch
    %129 = sbr.rel (0) target = $region37
  $region36: #{intra_gcn_forward.4} parent=0 // pred_region
    _
  $region37: #{intra_gcn_forward.4} parent=0 // pred_fallthru
    _

// kernel: intra_gcn_forward.5
$region0: #{intra_gcn_forward.5}
  #allocation0 [shape = 'u32[]', space=smem, size = 0x4, offset = 0x4, fixed_abs, tag = 'smem constant byte address 0x4 - core index']
  #allocation1 [shape = 'u32[144,128]{1,0:T(1,128)}', space=vmem, size = 0x12000, scoped, tag = 'internal scratch']
  #allocation2 [shape = 'f32[1,16]{1,0:T(1,128)}', space=vmem, size = 0x200, scoped, tag = 'scratch operand']
  %s0 = inlined_call_operand.vmem [shape: f32[8,16], index: 0, kind: input, shape index: {}]
  %s1 = inlined_call_operand.hbm [shape: f32[1,16], index: 1, kind: output, shape index: {}]
  %s2 = sld [smem:[#allocation0]]
  $region22: #{intra_gcn_forward.5} parent=0
    _
  %s4 = ssub.s32 1, %s2
  %s5 = scalar_select 0, %s4, %s2
  $region1: #{intra_gcn_forward.5} parent=0
    #allocation3 [shape = 'u8[512]{0}', space=vmem, size = 0x400, scoped, tag = 'output window, operand 0, single buffered']
    #allocation4 [shape = 's32[1]{0}', space=sflag, size = 0x4, scoped, tag = 'scoped memory for intra_gcn_forward.5']
    %6 = vsyncpa [#allocation4], 0
    // Predicated region
    $region2: #{intra_gcn_forward.5} parent=1 // pred_check
      _
    $region3: #{intra_gcn_forward.5} parent=1 // pred_check_branch
      %8 = sbr.rel (0) target = $region5
    $region4: #{intra_gcn_forward.5} parent=1 // pred_region
      _
    $region5: #{intra_gcn_forward.5} parent=1 // pred_fallthru
      _
    %p9 = scmp.eq.s32.totalorder 0, 0
    // Predicated region
    $region6: #{intra_gcn_forward.5} parent=1 // pred_check
      %p10 = pneg %p9
    $region7: #{intra_gcn_forward.5} parent=1 // pred_check_branch
      %12 = sbr.rel (%p10) target = $region9
    $region8: #{intra_gcn_forward.5} parent=1 // pred_region
      %vm13 = vcmask 122880
      %14 = vst.msk [vmem:[#allocation2] sm:$0x1] %vm13, 0.0
    $region9: #{intra_gcn_forward.5} parent=1 // pred_fallthru
      _
    %v15 = vld [vmem:[%s0] sm:$0xff]
    %s16 = smul.u32 0, 8
    %v17 = vlaneseq
    %v18 = vshrl.u32 %v17, 7
    %v19 = vstv %s16
    %v20 = vadd.s32 %v19, %v18
    %vm21 = vcmp.lt.s32.totalorder %v20, 8
    %v22 = vsel %vm21, 1, 0
    %v23 = vcvt.s32.f32 %v22
    %v24 = vld [vmem:[#allocation2] sm:$0x1]
    %v25 = vmul.f32 %v15, %v23
    %vm26 = vcmask 130048
    %v27 = vsel %vm26, %v25, 0.0
    %v28 = vrot.slane %v27, 4
    %v29 = vadd.f32 %v27, %v28
    %v30 = vrot.slane %v29, 2
    %v31 = vadd.f32 %v29, %v30
    %v32 = vrot.slane %v31, 1
    %v33 = vadd.f32 %v31, %v32
    %v34 = vadd.f32 %v24, %v33
    %vm35 = vcmask 122880
    %36 = vst.msk [vmem:[#allocation2] sm:$0x1] %vm35, %v34
    // Predicated region
    $region10: #{intra_gcn_forward.5} parent=1 // pred_check
      %p37 = pneg %p9
    $region11: #{intra_gcn_forward.5} parent=1 // pred_check_branch
      %39 = sbr.rel (%p37) target = $region13
    $region12: #{intra_gcn_forward.5} parent=1 // pred_region
      %v40 = vld [vmem:[#allocation2] sm:$0x1]
      %v41 = vmul.f32 %v40, 0.125
      %42 = vst.msk [vmem:[#allocation3] sm:$0x1] %vm35, %v41
    $region13: #{intra_gcn_forward.5} parent=1 // pred_fallthru
      _
    // Predicated region
    $region14: #{intra_gcn_forward.5} parent=1 // pred_check
      _
    $region15: #{intra_gcn_forward.5} parent=1 // pred_check_branch
      %44 = sbr.rel (0) target = $region17
    $region16: #{intra_gcn_forward.5} parent=1 // pred_region
      %s46 = ssub.s32 16, 16
      %47 = vsyncadd [#allocation4], %s46
      %s49 = sshll.u32 [#allocation3], 4
      %s50 = int_to_ptr.vmem [resolvable:$true] %s49
      %52 = dma.vmem_to_hbm [thread:$0]  %s50, 16, %s1, [#allocation4]
    $region17: #{intra_gcn_forward.5} parent=1 // pred_fallthru
      _
    // Predicated region
    $region18: #{intra_gcn_forward.5} parent=1 // pred_check
      _
    $region19: #{intra_gcn_forward.5} parent=1 // pred_check_branch
      %54 = sbr.rel (0) target = $region21
    $region20: #{intra_gcn_forward.5} parent=1 // pred_region
      %55 = dma.done [#allocation4], 16
    $region21: #{intra_gcn_forward.5} parent=1 // pred_fallthru
      _
    %56 = vsyncpa [#allocation4], 1

// kernel: intra_gcn_forward.3
$region0: #{intra_gcn_forward.3}
  #allocation0 [shape = 'u32[]', space=smem, size = 0x4, offset = 0x4, fixed_abs, tag = 'smem constant byte address 0x4 - core index']
  #allocation1 [shape = 'u32[144,128]{1,0:T(1,128)}', space=vmem, size = 0x12000, scoped, tag = 'internal scratch']
  #allocation2 [shape = 'f32[8,16]{1,0:T(8,128)}', space=vmem, size = 0x1000, scoped, tag = 'scratch operand']
  %s0 = inlined_call_operand.vmem [shape: bf16[8,8], index: 0, kind: input, shape index: {}]
  %s1 = inlined_call_operand.vmem [shape: f32[8,16], index: 1, kind: input, shape index: {}]
  %s2 = inlined_call_operand.vmem [shape: f32[1,16], index: 2, kind: input, shape index: {}]
  %s3 = inlined_call_operand.vmem [shape: f32[1,16], index: 3, kind: input, shape index: {}]
  %s4 = inlined_call_operand.vmem [shape: bf16[16,32], index: 4, kind: input, shape index: {}]
  %s5 = inlined_call_operand.vmem [shape: f32[1,32], index: 5, kind: input, shape index: {}]
  %s6 = inlined_call_operand.vmem [shape: f32[1,32], index: 6, kind: input, shape index: {}]
  %s7 = inlined_call_operand.vmem [shape: f32[1,32], index: 7, kind: input, shape index: {}]
  %s8 = inlined_call_operand.vmem [shape: bf16[32,16], index: 8, kind: input, shape index: {}]
  %s9 = inlined_call_operand.vmem [shape: f32[8,16], index: 9, kind: output, shape index: {}]
  %s10 = sld [smem:[#allocation0]]
  $region54: #{intra_gcn_forward.3} parent=0
    _
  %s12 = ssub.s32 1, %s10
  %s13 = scalar_select 0, %s12, %s10
  // Predicated region
  $region2: #{intra_gcn_forward.3} parent=0 // pred_check
    _
  $region3: #{intra_gcn_forward.3} parent=0 // pred_check_branch
    %15 = sbr.rel (0) target = $region5
  $region4: #{intra_gcn_forward.3} parent=0 // pred_region
    _
  $region5: #{intra_gcn_forward.3} parent=0 // pred_fallthru
    _
  // Predicated region
  $region6: #{intra_gcn_forward.3} parent=0 // pred_check
    _
  $region7: #{intra_gcn_forward.3} parent=0 // pred_check_branch
    %17 = sbr.rel (0) target = $region9
  $region8: #{intra_gcn_forward.3} parent=0 // pred_region
    _
  $region9: #{intra_gcn_forward.3} parent=0 // pred_fallthru
    _
  // Predicated region
  $region10: #{intra_gcn_forward.3} parent=0 // pred_check
    _
  $region11: #{intra_gcn_forward.3} parent=0 // pred_check_branch
    %19 = sbr.rel (0) target = $region13
  $region12: #{intra_gcn_forward.3} parent=0 // pred_region
    _
  $region13: #{intra_gcn_forward.3} parent=0 // pred_fallthru
    _
  // Predicated region
  $region14: #{intra_gcn_forward.3} parent=0 // pred_check
    _
  $region15: #{intra_gcn_forward.3} parent=0 // pred_check_branch
    %21 = sbr.rel (0) target = $region17
  $region16: #{intra_gcn_forward.3} parent=0 // pred_region
    _
  $region17: #{intra_gcn_forward.3} parent=0 // pred_fallthru
    _
  // Predicated region
  $region18: #{intra_gcn_forward.3} parent=0 // pred_check
    _
  $region19: #{intra_gcn_forward.3} parent=0 // pred_check_branch
    %23 = sbr.rel (0) target = $region21
  $region20: #{intra_gcn_forward.3} parent=0 // pred_region
    _
  $region21: #{intra_gcn_forward.3} parent=0 // pred_fallthru
    _
  // Predicated region
  $region22: #{intra_gcn_forward.3} parent=0 // pred_check
    _
  $region23: #{intra_gcn_forward.3} parent=0 // pred_check_branch
    %25 = sbr.rel (0) target = $region25
  $region24: #{intra_gcn_forward.3} parent=0 // pred_region
    _
  $region25: #{intra_gcn_forward.3} parent=0 // pred_fallthru
    _
  // Predicated region
  $region26: #{intra_gcn_forward.3} parent=0 // pred_check
    _
  $region27: #{intra_gcn_forward.3} parent=0 // pred_check_branch
    %27 = sbr.rel (0) target = $region29
  $region28: #{intra_gcn_forward.3} parent=0 // pred_region
    _
  $region29: #{intra_gcn_forward.3} parent=0 // pred_fallthru
    _
  // Predicated region
  $region30: #{intra_gcn_forward.3} parent=0 // pred_check
    _
  $region31: #{intra_gcn_forward.3} parent=0 // pred_check_branch
    %29 = sbr.rel (0) target = $region33
  $region32: #{intra_gcn_forward.3} parent=0 // pred_region
    _
  $region33: #{intra_gcn_forward.3} parent=0 // pred_fallthru
    _
  // Predicated region
  $region34: #{intra_gcn_forward.3} parent=0 // pred_check
    _
  $region35: #{intra_gcn_forward.3} parent=0 // pred_check_branch
    %31 = sbr.rel (0) target = $region37
  $region36: #{intra_gcn_forward.3} parent=0 // pred_region
    _
  $region37: #{intra_gcn_forward.3} parent=0 // pred_fallthru
    _
  %p33 = scmp.eq.s32.totalorder 0, 0
  // Predicated region
  $region38: #{intra_gcn_forward.3} parent=0 // pred_check
    %p34 = pneg %p33
  $region39: #{intra_gcn_forward.3} parent=0 // pred_check_branch
    %36 = sbr.rel (%p34) target = $region41
  $region40: #{intra_gcn_forward.3} parent=0 // pred_region
    %vm37 = vcmask 130048
    %38 = vst.msk [vmem:[#allocation2] sm:$0xff] %vm37, 0.0
  $region41: #{intra_gcn_forward.3} parent=0 // pred_fallthru
    _
  %v39 = vld [vmem:[%s1] sm:$0xff]
  %v40 = vld [vmem:[%s2] sm:$0x1]
  %v41 = vld [vmem:[%s3] sm:$0x1]
  %vm42 = vcmask 130048
  %v43 = vsel %vm42, %v39, 0.0
  %44 = vadd.xlane.f32.xlu0 %v43
  %v45 = vpop.xlane.xlu0 %44
  %v46 = vrcp.pop 16.0
  %v47 = vmul.f32 %v45, %v46
  %v48 = vsub.f32 %v39, %v47
  %v49 = vmul.f32 %v48, %v48
  %v50 = vsel %vm42, %v49, 0.0
  %51 = vadd.xlane.f32.xlu0 %v50
  %v52 = vpop.xlane.xlu0 %51
  %v53 = vmul.f32 %v52, %v46
  %v54 = vadd.f32 %v53, 1e-05
  %v55 = vrsqrt.pop %v54
  %v56 = vmul.f32 %v48, %v55
  %v58 = vlaneseq
  %v59 = vshrl.u32 %v58, 7
  %v60 = vsub.s32 0, %v59
  %v61 = vrot.slane %v40, %v60
  %v63 = vmul.f32 %v56, %v61
  %v65 = vlaneseq
  %v66 = vshrl.u32 %v65, 7
  %v67 = vsub.s32 0, %v66
  %v68 = vrot.slane %v41, %v67
  %v70 = vadd.f32 %v63, %v68
  %v71 = vld [vmem:[#allocation2] sm:$0xff]
  %v72 = vld [vmem:[%s0] sm:$0xf]
  %v73 = vpack.c.bf16 %v70, %v70
  %vm74 = vcmask 64512
  %v76 = vsel %vm74, %v72, 0
  %vm78 = vcmask 1043456
  %v80 = vsel %vm78, %v73, 0
  %82 = vmatprep.subr.bf16.mxu0 0
  %83 = vmatpush1.bf16.msra.mxu0 %v80
  %84 = vmatprep.subr.bf16.mxu0 0
  %85 = vmatpush1.bf16.msra.mxu0 0
  %86 = vmatprep.subr.bf16.mxu0 0
  %87 = vmatpush1.bf16.msra.mxu0 0
  %88 = vmatprep.subr.bf16.mxu0 0
  %89 = vmatpush1.bf16.msra.mxu0 0
  %90 = vmatprep.subr.bf16.mxu0 0
  %91 = vmatpush1.bf16.msra.mxu0 0
  %92 = vmatprep.subr.bf16.mxu0 0
  %93 = vmatpush1.bf16.msra.mxu0 0
  %94 = vmatprep.subr.bf16.mxu0 0
  %95 = vmatpush1.bf16.msra.mxu0 0
  %96 = vmatprep.subr.bf16.mxu0 0
  %97 = vmatpush1.bf16.msra.mxu0 0
  %98 = vmatprep.subr.bf16.mxu0 0
  %99 = vmatpush1.bf16.msra.mxu0 0
  %100 = vmatprep.subr.bf16.mxu0 0
  %101 = vmatpush1.bf16.msra.mxu0 0
  %102 = vmatprep.subr.bf16.mxu0 0
  %103 = vmatpush1.bf16.msra.mxu0 0
  %104 = vmatprep.subr.bf16.mxu0 0
  %105 = vmatpush1.bf16.msra.mxu0 0
  %106 = vmatprep.subr.bf16.mxu0 0
  %107 = vmatpush1.bf16.msra.mxu0 0
  %108 = vmatprep.subr.bf16.mxu0 0
  %109 = vmatpush1.bf16.msra.mxu0 0
  %110 = vmatprep.subr.bf16.mxu0 0
  %111 = vmatpush1.bf16.msra.mxu0 0
  %112 = vmatprep.subr.bf16.mxu0 0
  %113 = vmatpush1.bf16.msra.mxu0 0
  %114 = vmatprep.mubr.bf16.mxu0 0
  %115 = vmatmul.mubr.bf16.gmra.mrb[0].mxu0 %v76
  %v116 = vpop.f32.mrb[0].mxu0
  %v117 = vadd.f32 0.0, %v116
  %v118 = vpop.f32.mrb[0].mxu0
  %v119 = vpop.f32.mrb[0].mxu0
  %v120 = vpop.f32.mrb[0].mxu0
  %121 = vdwg.mxu0
  %v122 = vadd.f32 %v71, %v117
  %123 = vst.msk [vmem:[#allocation2] sm:$0xff] %vm42, %v122
  // Predicated region
  $region42: #{intra_gcn_forward.3} parent=0 // pred_check
    %p124 = pneg %p33
  $region43: #{intra_gcn_forward.3} parent=0 // pred_check_branch
    %126 = sbr.rel (%p124) target = $region45
  $region44: #{intra_gcn_forward.3} parent=0 // pred_region
    %v127 = vld [vmem:[#allocation2] sm:$0xff]
    %v128 = vpack.c.bf16 %v127, %v127
    %v129 = vld [vmem:[%s4] sm:$0xf]
    %v130 = vld [vmem:[%s4 + $0x4] sm:$0xf]
    %v131 = vld [vmem:[%s5] sm:$0x1]
    %v133 = vlaneseq
    %v134 = vshrl.u32 %v133, 7
    %v135 = vsub.s32 0, %v134
    %v136 = vrot.slane %v131, %v135
    %v140 = vunpack.c.l.b16 %v129
    %v141 = vunpack.c.l.b16 %v130
    %v142 = vpack.c.b16 %v141, %v140
    %v145 = vsel %vm42, %v128, 0
    %147 = vmatprep.subr.bf16.mxu0 0
    %148 = vmatpush1.bf16.msra.mxu0 %v142
    %149 = vmatprep.subr.bf16.mxu0 0
    %150 = vmatpush1.bf16.msra.mxu0 0
    %151 = vmatprep.subr.bf16.mxu0 0
    %152 = vmatpush1.bf16.msra.mxu0 0
    %153 = vmatprep.subr.bf16.mxu0 0
    %154 = vmatpush1.bf16.msra.mxu0 0
    %155 = vmatprep.subr.bf16.mxu0 0
    %156 = vmatpush1.bf16.msra.mxu0 0
    %157 = vmatprep.subr.bf16.mxu0 0
    %158 = vmatpush1.bf16.msra.mxu0 0
    %159 = vmatprep.subr.bf16.mxu0 0
    %160 = vmatpush1.bf16.msra.mxu0 0
    %161 = vmatprep.subr.bf16.mxu0 0
    %162 = vmatpush1.bf16.msra.mxu0 0
    %163 = vmatprep.subr.bf16.mxu0 0
    %164 = vmatpush1.bf16.msra.mxu0 0
    %165 = vmatprep.subr.bf16.mxu0 0
    %166 = vmatpush1.bf16.msra.mxu0 0
    %167 = vmatprep.subr.bf16.mxu0 0
    %168 = vmatpush1.bf16.msra.mxu0 0
    %169 = vmatprep.subr.bf16.mxu0 0
    %170 = vmatpush1.bf16.msra.mxu0 0
    %171 = vmatprep.subr.bf16.mxu0 0
    %172 = vmatpush1.bf16.msra.mxu0 0
    %173 = vmatprep.subr.bf16.mxu0 0
    %174 = vmatpush1.bf16.msra.mxu0 0
    %175 = vmatprep.subr.bf16.mxu0 0
    %176 = vmatpush1.bf16.msra.mxu0 0
    %177 = vmatprep.subr.bf16.mxu0 0
    %178 = vmatpush1.bf16.msra.mxu0 0
    %179 = vmatprep.mubr.bf16.mxu0 0
    %180 = vmatmul.mubr.bf16.gmra.mrb[0].mxu0 %v145
    %v181 = vpop.f32.mrb[0].mxu0
    %v182 = vadd.f32 %v136, %v181
    %v183 = vpop.f32.mrb[0].mxu0
    %v184 = vpop.f32.mrb[0].mxu0
    %v185 = vpop.f32.mrb[0].mxu0
    %186 = vdwg.mxu0
    %v187 = vmax.f32 %v182, 0.0
    %v188 = vld [vmem:[%s6] sm:$0x1]
    %v189 = vld [vmem:[%s7] sm:$0x1]
    %vm190 = vcmask 261120
    %v191 = vsel %vm190, %v187, 0.0
    %192 = vadd.xlane.f32.xlu0 %v191
    %v193 = vpop.xlane.xlu0 %192
    %v194 = vrcp.pop 32.0
    %v195 = vmul.f32 %v193, %v194
    %v196 = vsub.f32 %v187, %v195
    %v197 = vmul.f32 %v196, %v196
    %v198 = vsel %vm190, %v197, 0.0
    %199 = vadd.xlane.f32.xlu0 %v198
    %v200 = vpop.xlane.xlu0 %199
    %v201 = vmul.f32 %v200, %v194
    %v202 = vadd.f32 %v201, 1e-05
    %v203 = vrsqrt.pop %v202
    %v204 = vmul.f32 %v196, %v203
    %v206 = vlaneseq
    %v207 = vshrl.u32 %v206, 7
    %v208 = vsub.s32 0, %v207
    %v209 = vrot.slane %v188, %v208
    %v211 = vmul.f32 %v204, %v209
    %v213 = vlaneseq
    %v214 = vshrl.u32 %v213, 7
    %v215 = vsub.s32 0, %v214
    %v216 = vrot.slane %v189, %v215
    %v218 = vadd.f32 %v211, %v216
    %v219 = vpack.c.bf16 %v218, %v218
    %v220 = vld [vmem:[%s8] sm:$0xf]
    %v221 = vld [vmem:[%s8 + $0x4] sm:$0xf]
    %v222 = vld [vmem:[%s8 + $0x8] sm:$0xf]
    %v223 = vld [vmem:[%s8 + $0xc] sm:$0xf]
    %v228 = vunpack.c.l.b16 %v220
    %v229 = vunpack.c.l.b16 %v221
    %v230 = vunpack.c.l.b16 %v222
    %v231 = vunpack.c.l.b16 %v223
    %v232 = vpack.c.b16 %v229, %v228
    %v233 = vpack.c.b16 %v231, %v230
    %v237 = vsel %vm190, %v219, 0
    %239 = vmatprep.subr.bf16.mxu0 0
    %240 = vmatpush1.bf16.msra.mxu0 %v232
    %241 = vmatprep.subr.bf16.mxu0 0
    %242 = vmatpush1.bf16.msra.mxu0 %v233
    %243 = vmatprep.subr.bf16.mxu0 0
    %244 = vmatpush1.bf16.msra.mxu0 0
    %245 = vmatprep.subr.bf16.mxu0 0
    %246 = vmatpush1.bf16.msra.mxu0 0
    %247 = vmatprep.subr.bf16.mxu0 0
    %248 = vmatpush1.bf16.msra.mxu0 0
    %249 = vmatprep.subr.bf16.mxu0 0
    %250 = vmatpush1.bf16.msra.mxu0 0
    %251 = vmatprep.subr.bf16.mxu0 0
    %252 = vmatpush1.bf16.msra.mxu0 0
    %253 = vmatprep.subr.bf16.mxu0 0
    %254 = vmatpush1.bf16.msra.mxu0 0
    %255 = vmatprep.subr.bf16.mxu0 0
    %256 = vmatpush1.bf16.msra.mxu0 0
    %257 = vmatprep.subr.bf16.mxu0 0
    %258 = vmatpush1.bf16.msra.mxu0 0
    %259 = vmatprep.subr.bf16.mxu0 0
    %260 = vmatpush1.bf16.msra.mxu0 0
    %261 = vmatprep.subr.bf16.mxu0 0
    %262 = vmatpush1.bf16.msra.mxu0 0
    %263 = vmatprep.subr.bf16.mxu0 0
    %264 = vmatpush1.bf16.msra.mxu0 0
    %265 = vmatprep.subr.bf16.mxu0 0
    %266 = vmatpush1.bf16.msra.mxu0 0
    %267 = vmatprep.subr.bf16.mxu0 0
    %268 = vmatpush1.bf16.msra.mxu0 0
    %269 = vmatprep.subr.bf16.mxu0 0
    %270 = vmatpush1.bf16.msra.mxu0 0
    %271 = vmatprep.mubr.bf16.mxu0 0
    %272 = vmatmul.mubr.bf16.gmra.mrb[0].mxu0 %v237
    %v273 = vpop.f32.mrb[0].mxu0
    %v274 = vadd.f32 0.0, %v273
    %v275 = vpop.f32.mrb[0].mxu0
    %v276 = vpop.f32.mrb[0].mxu0
    %v277 = vpop.f32.mrb[0].mxu0
    %278 = vdwg.mxu0
    %279 = vst.msk [vmem:[%s9] sm:$0xff] %vm42, %v274
  $region45: #{intra_gcn_forward.3} parent=0 // pred_fallthru
    _
  // Predicated region
  $region46: #{intra_gcn_forward.3} parent=0 // pred_check
    _
  $region47: #{intra_gcn_forward.3} parent=0 // pred_check_branch
    %281 = sbr.rel (0) target = $region49
  $region48: #{intra_gcn_forward.3} parent=0 // pred_region
    _
  $region49: #{intra_gcn_forward.3} parent=0 // pred_fallthru
    _
  // Predicated region
  $region50: #{intra_gcn_forward.3} parent=0 // pred_check
    _
  $region51: #{intra_gcn_forward.3} parent=0 // pred_check_branch
    %283 = sbr.rel (0) target = $region53
  $region52: #{intra_gcn_forward.3} parent=0 // pred_region
    _
  $region53: #{intra_gcn_forward.3} parent=0 // pred_fallthru
    _

</llo_original>
